<compile_context>
chip_gen: v7x
topology: tpu7x:2x2x1
jax: 0.10.0
libtpu: 0.0.40
codegen_flags: <defaults>
</compile_context>

<pallas_src>
import functools

import jax
import jax.numpy as jnp
from jax.experimental import pallas as pl
from jax.experimental.pallas import tpu as pltpu


def cnn1_gemm_bn_relu_kernel(w_ref, p_ref, gb_ref, out_ref):
    # w_ref  : (Cout, KKC)       flattened conv weight (row = output channel)
    # p_ref  : (KKC, M)          im2col patch matrix, M = N*Ho*Wo (lane axis)
    # gb_ref : (Cout, 2)         column 0 = BN gamma, column 1 = BN beta
    # out_ref: (N, Cout, Ho*Wo)  NCHW-ordered output (spatial flattened)
    n_batch, _, hw = out_ref.shape
    m = p_ref.shape[1]

    # Single MXU contraction over K*K*Cin, f32 accumulation.
    acc = jnp.dot(w_ref[...], p_ref[...], preferred_element_type=jnp.float32)

    # One-pass BatchNorm statistics per channel (per row), biased variance.
    # TODO(synk): single-pass E[x^2]-mean^2 can cancel catastrophically if this
    # kernel is reused with weights that produce |mean| >> std; fine for CNN1.
    inv_m = jnp.float32(1.0 / m)
    s1 = jnp.sum(acc, axis=1, keepdims=True)
    s2 = jnp.sum(acc * acc, axis=1, keepdims=True)
    mean = s1 * inv_m
    var = jnp.maximum(s2 * inv_m - mean * mean, jnp.float32(0.0))  # clamp

    # Fuse normalization + affine into one scale/shift (rsqrt -> EUP slot).
    gamma = gb_ref[:, 0:1]
    beta = gb_ref[:, 1:2]
    scale = jax.lax.rsqrt(var + jnp.float32(1e-5)) * gamma
    shift = beta - mean * scale
    y = jnp.maximum(acc * scale + shift, jnp.float32(0.0)).astype(out_ref.dtype)

    # Lane-dense per-batch slabs: M is ordered (n, ho, wo), so column block n
    # is exactly the (Cout, Ho*Wo) slab for batch element n.  Ho*Wo = 256 is a
    # multiple of 128 -> unmasked vst.  Static Python loop (N is tiny).
    for n in range(n_batch):
        out_ref[n] = y[:, n * hw:(n + 1) * hw]


@functools.partial(jax.jit, static_argnames=("pad",))
def cnn1_forward(x_nchw, weight, bias, gamma, beta, *, pad):
    """x_nchw: (N, C, H, W) float32. weight: (Cout, Cin, K, K)."""
    N, C, H, W = x_nchw.shape
    Cout, Cin, K, _ = weight.shape
    Ho = H + 2 * pad - K + 1
    Wo = W + 2 * pad - K + 1
    M = N * Ho * Wo
    KKC = K * K * Cin

    # Conv bias cancels exactly under training-mode BatchNorm (a per-channel
    # constant shifts the mean by the same constant); it is zero in CNN1.
    # TODO(synk): re-add the bias if the module is ever run with eval-mode
    # (running-stat) BatchNorm.
    del bias

    # ---- im2col glue (XLA, outside the kernel) -----------------------------
    # Pad, then transpose ONCE to (C, N, Hp, Wp) so the stacked taps land
    # directly in (K*K, C, N, Ho, Wo) order -- no post-stack 5-D transpose.
    xp = jnp.pad(x_nchw, ((0, 0), (0, 0), (pad, pad), (pad, pad)))
    xp = jnp.transpose(xp, (1, 0, 2, 3))                     # (C, N, Hp, Wp)
    taps = [xp[:, :, kh:kh + Ho, kw:kw + Wo]
            for kh in range(K) for kw in range(K)]           # K*K x (C,N,Ho,Wo)
    pt = jnp.stack(taps, axis=0).reshape(KKC, M)             # (KKC, M)

    # Weight flattened with matching (kh, kw, cin) ordering along KKC.
    wf = jnp.transpose(weight, (0, 2, 3, 1)).reshape(Cout, KKC)
    wf = wf.astype(jnp.float32)

    # Merged BN affine parameters: column 0 = gamma, column 1 = beta.
    gb = jnp.stack([gamma, beta], axis=1).astype(jnp.float32)  # (Cout, 2)

    cost = pl.CostEstimate(
        flops=2 * Cout * KKC * M,
        transcendentals=Cout,
        bytes_accessed=(KKC * M + Cout * KKC + Cout * 2 + Cout * M) * 4,
    )

    out3d = pl.pallas_call(
        cnn1_gemm_bn_relu_kernel,
        out_shape=jax.ShapeDtypeStruct((N, Cout, Ho * Wo), x_nchw.dtype),
        in_specs=[pl.BlockSpec(memory_space=pltpu.MemorySpace.VMEM)] * 3,
        out_specs=pl.BlockSpec(memory_space=pltpu.MemorySpace.VMEM),
        cost_estimate=cost,
    )(wf, pt, gb)

    # Free reshape only -- layout already NCHW-ordered inside the kernel.
    return out3d.reshape(N, Cout, Ho, Wo)


def cnn1_reference(x_nchw, weight, bias, gamma, beta, *, pad):
    """Pure-JAX reference (same semantics as the PyTorch module)."""
    out = jax.lax.conv_general_dilated(
        x_nchw, weight, window_strides=(1, 1),
        padding=[(pad, pad), (pad, pad)],
        dimension_numbers=("NCHW", "OIHW", "NCHW"))
    out = out + bias[None, :, None, None]
    mean = jnp.mean(out, axis=(0, 2, 3), keepdims=True)
    var = jnp.mean((out - mean) ** 2, axis=(0, 2, 3), keepdims=True)
    out = (out - mean) * jax.lax.rsqrt(var + 1e-5)
    out = out * gamma[None, :, None, None] + beta[None, :, None, None]
    return jnp.maximum(out, 0.0)


if __name__ == "__main__":
    # Small shapes consistent with the module: channel=4, map_size=3, pad=1.
    N, C, H, W = 2, 4, 16, 16
    map_size, pad = 3, 1

    key = jax.random.PRNGKey(0)
    x = jax.random.normal(key, (N, C, H, W), dtype=jnp.float32)

    # Deterministic parameters (exactly as __init__ specifies).
    weight = jnp.ones((C, C, map_size, map_size), dtype=jnp.float32)
    bias = jnp.zeros((C,), dtype=jnp.float32)
    gamma = jnp.ones((C,), dtype=jnp.float32)   # BatchNorm2d default weight
    beta = jnp.zeros((C,), dtype=jnp.float32)   # BatchNorm2d default bias

    out = cnn1_forward(x, weight, bias, gamma, beta, pad=pad)
    out = jax.block_until_ready(out)

    ref = cnn1_reference(x, weight, bias, gamma, beta, pad=pad)
    assert out.shape == (N, C, H, W)
    assert jnp.max(jnp.abs(out - ref)) < 1e-4, "mismatch vs reference"

    print("KERNEL_OK")
</pallas_src>

<mosaic_0001>
module attributes {stable_mosaic.version = 11 : i64} {
  func.func @cnn1_gemm_bn_relu_kernel(%arg0: memref<4x36xf32, #tpu.memory_space<vmem>>, %arg1: memref<36x512xf32, #tpu.memory_space<vmem>>, %arg2: memref<4x2xf32, #tpu.memory_space<vmem>>, %arg3: memref<2x4x256xf32, #tpu.memory_space<vmem>>) attributes {dimension_semantics = [], scalar_prefetch = 0 : i64, scratch_operands = 0 : i64, tpu.core_type = #tpu.core_type<tc>} {
    %c0 = arith.constant 0 : index
    %c0_0 = arith.constant 0 : index
    %0 = vector.load %arg0[%c0, %c0_0] : memref<4x36xf32, #tpu.memory_space<vmem>>, vector<4x36xf32>
    %c0_1 = arith.constant 0 : index
    %c0_2 = arith.constant 0 : index
    %1 = vector.load %arg1[%c0_1, %c0_2] : memref<36x512xf32, #tpu.memory_space<vmem>>, vector<36x512xf32>
    %cst = arith.constant dense<0.000000e+00> : vector<4x512xf32>
    %2 = tpu.matmul %0, %1, %cst {dimension_numbers = #tpu.dot_dimension_numbers<[1], [0], [0], [1], [0, 0, 1, 1], [], []>} : vector<4x36xf32>, vector<36x512xf32>, vector<4x512xf32> -> vector<4x512xf32>
    %cst_3 = arith.constant dense<0.000000e+00> : vector<4xf32>
    %3 = vector.multi_reduction <add>, %2, %cst_3 [1] : vector<4x512xf32> to vector<4xf32>
    %4 = vector.shape_cast %3 : vector<4xf32> to vector<4x1xf32>
    %5 = arith.mulf %2, %2 : vector<4x512xf32>
    %cst_4 = arith.constant dense<0.000000e+00> : vector<4xf32>
    %6 = vector.multi_reduction <add>, %5, %cst_4 [1] : vector<4x512xf32> to vector<4xf32>
    %7 = vector.shape_cast %6 : vector<4xf32> to vector<4x1xf32>
    %cst_5 = arith.constant 0.001953125 : f32
    %8 = vector.broadcast %cst_5 : f32 to vector<4x1xf32>
    %9 = arith.mulf %4, %8 : vector<4x1xf32>
    %cst_6 = arith.constant 0.001953125 : f32
    %10 = vector.broadcast %cst_6 : f32 to vector<4x1xf32>
    %11 = arith.mulf %7, %10 : vector<4x1xf32>
    %12 = arith.mulf %9, %9 : vector<4x1xf32>
    %13 = arith.subf %11, %12 : vector<4x1xf32>
    %cst_7 = arith.constant 0.000000e+00 : f32
    %14 = vector.broadcast %cst_7 : f32 to vector<4x1xf32>
    %15 = arith.maximumf %13, %14 : vector<4x1xf32>
    %c0_8 = arith.constant 0 : index
    %c0_9 = arith.constant 0 : index
    %16 = vector.load %arg2[%c0_8, %c0_9] : memref<4x2xf32, #tpu.memory_space<vmem>>, vector<4x1xf32>
    %c0_10 = arith.constant 0 : index
    %c1 = arith.constant 1 : index
    %17 = vector.load %arg2[%c0_10, %c1] : memref<4x2xf32, #tpu.memory_space<vmem>>, vector<4x1xf32>
    %cst_11 = arith.constant 9.99999974E-6 : f32
    %18 = vector.broadcast %cst_11 : f32 to vector<4x1xf32>
    %19 = arith.addf %15, %18 : vector<4x1xf32>
    %20 = math.rsqrt %19 : vector<4x1xf32>
    %21 = arith.mulf %20, %16 : vector<4x1xf32>
    %22 = arith.mulf %9, %21 : vector<4x1xf32>
    %23 = arith.subf %17, %22 : vector<4x1xf32>
    %24 = vector.broadcast %21 : vector<4x1xf32> to vector<4x512xf32>
    %25 = arith.mulf %2, %24 : vector<4x512xf32>
    %26 = vector.broadcast %23 : vector<4x1xf32> to vector<4x512xf32>
    %27 = arith.addf %25, %26 : vector<4x512xf32>
    %cst_12 = arith.constant 0.000000e+00 : f32
    %28 = vector.broadcast %cst_12 : f32 to vector<4x512xf32>
    %29 = arith.maximumf %27, %28 : vector<4x512xf32>
    %30 = vector.extract_strided_slice %29 {offsets = [0, 0], sizes = [4, 256], strides = [1, 1]} : vector<4x512xf32> to vector<4x256xf32>
    %c0_13 = arith.constant 0 : index
    %c0_14 = arith.constant 0 : index
    %c0_15 = arith.constant 0 : index
    %31 = vector.load %arg3[%c0_13, %c0_14, %c0_15] : memref<2x4x256xf32, #tpu.memory_space<vmem>>, vector<1x4x256xf32>
    %32 = vector.shape_cast %31 : vector<1x4x256xf32> to vector<4x256xf32>
    %33 = vector.shape_cast %30 : vector<4x256xf32> to vector<1x4x256xf32>
    tpu.vector_store %arg3[%c0_13, %c0_14, %c0_15], %33 {strides = array<i32>} : memref<2x4x256xf32, #tpu.memory_space<vmem>>, vector<1x4x256xf32>,
    %34 = vector.extract_strided_slice %29 {offsets = [0, 256], sizes = [4, 256], strides = [1, 1]} : vector<4x512xf32> to vector<4x256xf32>
    %c1_16 = arith.constant 1 : index
    %c0_17 = arith.constant 0 : index
    %c0_18 = arith.constant 0 : index
    %35 = vector.load %arg3[%c1_16, %c0_17, %c0_18] : memref<2x4x256xf32, #tpu.memory_space<vmem>>, vector<1x4x256xf32>
    %36 = vector.shape_cast %35 : vector<1x4x256xf32> to vector<4x256xf32>
    %37 = vector.shape_cast %34 : vector<4x256xf32> to vector<1x4x256xf32>
    tpu.vector_store %arg3[%c1_16, %c0_17, %c0_18], %37 {strides = array<i32>} : memref<2x4x256xf32, #tpu.memory_space<vmem>>, vector<1x4x256xf32>,
    return
  }
}

</mosaic_0001>

<llo_original>
// kernel: cnn1_forward.1
$region0: #{cnn1_forward.1}
  #allocation0 [shape = 'u32[]', space=smem, size = 0x4, offset = 0x4, fixed_abs, tag = 'smem constant byte address 0x4 - core index']
  #allocation1 [shape = 'u32[144,128]{1,0:T(1,128)}', space=vmem, size = 0x12000, scoped, tag = 'internal scratch']
  %s0 = inlined_call_operand.vmem [shape: f32[4,36], index: 0, kind: input, shape index: {}]
  %s1 = inlined_call_operand.vmem [shape: f32[36,512], index: 1, kind: input, shape index: {}]
  %s2 = inlined_call_operand.vmem [shape: f32[4,2], index: 2, kind: input, shape index: {}]
  %s3 = inlined_call_operand.vmem [shape: f32[2,4,256], index: 3, kind: output, shape index: {}]
  %s4 = sld [smem:[#allocation0]]
  $region22: #{cnn1_forward.1} parent=0
    _
  %s6 = ssub.s32 1, %s4
  %s7 = scalar_select 0, %s6, %s4
  // Predicated region
  $region2: #{cnn1_forward.1} parent=0 // pred_check
    _
  $region3: #{cnn1_forward.1} parent=0 // pred_check_branch
    %9 = sbr.rel (0) target = $region5
  $region4: #{cnn1_forward.1} parent=0 // pred_region
    _
  $region5: #{cnn1_forward.1} parent=0 // pred_fallthru
    _
  // Predicated region
  $region6: #{cnn1_forward.1} parent=0 // pred_check
    _
  $region7: #{cnn1_forward.1} parent=0 // pred_check_branch
    %11 = sbr.rel (0) target = $region9
  $region8: #{cnn1_forward.1} parent=0 // pred_region
    _
  $region9: #{cnn1_forward.1} parent=0 // pred_fallthru
    _
  // Predicated region
  $region10: #{cnn1_forward.1} parent=0 // pred_check
    _
  $region11: #{cnn1_forward.1} parent=0 // pred_check_branch
    %13 = sbr.rel (0) target = $region13
  $region12: #{cnn1_forward.1} parent=0 // pred_region
    _
  $region13: #{cnn1_forward.1} parent=0 // pred_fallthru
    _
  %v14 = vld [vmem:[%s0] sm:$0xf]
  %v15 = vld [vmem:[%s1] sm:$0xff]
  %v16 = vld [vmem:[%s1 + $0x8] sm:$0xff]
  %v17 = vld [vmem:[%s1 + $0x10] sm:$0xff]
  %v18 = vld [vmem:[%s1 + $0x18] sm:$0xff]
  %v19 = vld [vmem:[%s1 + $0x20] sm:$0xff]
  %v20 = vld [vmem:[%s1 + $0x28] sm:$0xff]
  %v21 = vld [vmem:[%s1 + $0x30] sm:$0xff]
  %v22 = vld [vmem:[%s1 + $0x38] sm:$0xff]
  %v23 = vld [vmem:[%s1 + $0x40] sm:$0xff]
  %v24 = vld [vmem:[%s1 + $0x48] sm:$0xff]
  %v25 = vld [vmem:[%s1 + $0x50] sm:$0xff]
  %v26 = vld [vmem:[%s1 + $0x58] sm:$0xff]
  %v27 = vld [vmem:[%s1 + $0x60] sm:$0xff]
  %v28 = vld [vmem:[%s1 + $0x68] sm:$0xff]
  %v29 = vld [vmem:[%s1 + $0x70] sm:$0xff]
  %v30 = vld [vmem:[%s1 + $0x78] sm:$0xff]
  %v31 = vld [vmem:[%s1 + $0x80] sm:$0xf]
  %v32 = vld [vmem:[%s1 + $0x88] sm:$0xf]
  %v33 = vld [vmem:[%s1 + $0x90] sm:$0xf]
  %v34 = vld [vmem:[%s1 + $0x98] sm:$0xf]
  %vm35 = vcmask 293888
  %v37 = vsel %vm35, %v14, 0
  %vm39 = vcmask 1043456
  %v41 = vsel %vm39, %v31, 0
  %v44 = vsel %vm39, %v32, 0
  %v47 = vsel %vm39, %v33, 0
  %v50 = vsel %vm39, %v34, 0
  %52 = vmatprep.subr.mxu0 %v16
  %53 = vmatpush1.msra.mxu0 %v15
  %54 = vmatprep.subr.mxu0 %v20
  %55 = vmatpush1.msra.mxu0 %v19
  %56 = vmatprep.subr.mxu0 %v24
  %57 = vmatpush1.msra.mxu0 %v23
  %58 = vmatprep.subr.mxu0 %v28
  %59 = vmatpush1.msra.mxu0 %v27
  %60 = vmatprep.subr.mxu0 %v44
  %61 = vmatpush1.msra.mxu0 %v41
  %62 = vmatprep.subr.mxu0 0.0
  %63 = vmatpush1.msra.mxu0 0.0
  %64 = vmatprep.subr.mxu0 0.0
  %65 = vmatpush1.msra.mxu0 0.0
  %66 = vmatprep.subr.mxu0 0.0
  %67 = vmatpush1.msra.mxu0 0.0
  %68 = vmatprep.subr.mxu0 0.0
  %69 = vmatpush1.msra.mxu0 0.0
  %70 = vmatprep.subr.mxu0 0.0
  %71 = vmatpush1.msra.mxu0 0.0
  %72 = vmatprep.subr.mxu0 0.0
  %73 = vmatpush1.msra.mxu0 0.0
  %74 = vmatprep.subr.mxu0 0.0
  %75 = vmatpush1.msra.mxu0 0.0
  %76 = vmatprep.subr.mxu0 0.0
  %77 = vmatpush1.msra.mxu0 0.0
  %78 = vmatprep.subr.mxu0 0.0
  %79 = vmatpush1.msra.mxu0 0.0
  %80 = vmatprep.subr.mxu0 0.0
  %81 = vmatpush1.msra.mxu0 0.0
  %82 = vmatprep.subr.mxu0 0.0
  %83 = vmatpush1.msra.mxu0 0.0
  %84 = vmatprep.subr.mxu0 0.0
  %85 = vmatpush1.msra.mxu0 0.0
  %86 = vmatprep.subr.mxu0 0.0
  %87 = vmatpush1.msra.mxu0 0.0
  %88 = vmatprep.subr.mxu0 0.0
  %89 = vmatpush1.msra.mxu0 0.0
  %90 = vmatprep.subr.mxu0 0.0
  %91 = vmatpush1.msra.mxu0 0.0
  %92 = vmatprep.subr.mxu0 0.0
  %93 = vmatpush1.msra.mxu0 0.0
  %94 = vmatprep.subr.mxu0 0.0
  %95 = vmatpush1.msra.mxu0 0.0
  %96 = vmatprep.subr.mxu0 0.0
  %97 = vmatpush1.msra.mxu0 0.0
  %98 = vmatprep.subr.mxu0 0.0
  %99 = vmatpush1.msra.mxu0 0.0
  %100 = vmatprep.subr.mxu0 0.0
  %101 = vmatpush1.msra.mxu0 0.0
  %102 = vmatprep.subr.mxu0 0.0
  %103 = vmatpush1.msra.mxu0 0.0
  %104 = vmatprep.subr.mxu0 0.0
  %105 = vmatpush1.msra.mxu0 0.0
  %106 = vmatprep.subr.mxu0 0.0
  %107 = vmatpush1.msra.mxu0 0.0
  %108 = vmatprep.subr.mxu0 0.0
  %109 = vmatpush1.msra.mxu0 0.0
  %110 = vmatprep.subr.mxu0 0.0
  %111 = vmatpush1.msra.mxu0 0.0
  %112 = vmatprep.subr.mxu0 0.0
  %113 = vmatpush1.msra.mxu0 0.0
  %114 = vmatprep.subr.mxu0 0.0
  %115 = vmatpush1.msra.mxu0 0.0
  %116 = vmatprep.mubr.f32.mxu0 0.0
  %117 = vmatmul.mubr.f32.gmra.mrb[0].mxu0 %v37
  %v118 = vpop.f32.mrb[0].mxu0
  %v119 = vadd.f32 0.0, %v118
  %v120 = vpop.f32.mrb[0].mxu0
  %v121 = vadd.f32 0.0, %v120
  %122 = vdwg.mxu0
  %123 = vmatprep.subr.mxu0 %v18
  %124 = vmatpush1.msra.mxu0 %v17
  %125 = vmatprep.subr.mxu0 %v22
  %126 = vmatpush1.msra.mxu0 %v21
  %127 = vmatprep.subr.mxu0 %v26
  %128 = vmatpush1.msra.mxu0 %v25
  %129 = vmatprep.subr.mxu0 %v30
  %130 = vmatpush1.msra.mxu0 %v29
  %131 = vmatprep.subr.mxu0 %v50
  %132 = vmatpush1.msra.mxu0 %v47
  %133 = vmatprep.subr.mxu0 0.0
  %134 = vmatpush1.msra.mxu0 0.0
  %135 = vmatprep.subr.mxu0 0.0
  %136 = vmatpush1.msra.mxu0 0.0
  %137 = vmatprep.subr.mxu0 0.0
  %138 = vmatpush1.msra.mxu0 0.0
  %139 = vmatprep.subr.mxu0 0.0
  %140 = vmatpush1.msra.mxu0 0.0
  %141 = vmatprep.subr.mxu0 0.0
  %142 = vmatpush1.msra.mxu0 0.0
  %143 = vmatprep.subr.mxu0 0.0
  %144 = vmatpush1.msra.mxu0 0.0
  %145 = vmatprep.subr.mxu0 0.0
  %146 = vmatpush1.msra.mxu0 0.0
  %147 = vmatprep.subr.mxu0 0.0
  %148 = vmatpush1.msra.mxu0 0.0
  %149 = vmatprep.subr.mxu0 0.0
  %150 = vmatpush1.msra.mxu0 0.0
  %151 = vmatprep.subr.mxu0 0.0
  %152 = vmatpush1.msra.mxu0 0.0
  %153 = vmatprep.subr.mxu0 0.0
  %154 = vmatpush1.msra.mxu0 0.0
  %155 = vmatprep.subr.mxu0 0.0
  %156 = vmatpush1.msra.mxu0 0.0
  %157 = vmatprep.subr.mxu0 0.0
  %158 = vmatpush1.msra.mxu0 0.0
  %159 = vmatprep.subr.mxu0 0.0
  %160 = vmatpush1.msra.mxu0 0.0
  %161 = vmatprep.subr.mxu0 0.0
  %162 = vmatpush1.msra.mxu0 0.0
  %163 = vmatprep.subr.mxu0 0.0
  %164 = vmatpush1.msra.mxu0 0.0
  %165 = vmatprep.subr.mxu0 0.0
  %166 = vmatpush1.msra.mxu0 0.0
  %167 = vmatprep.subr.mxu0 0.0
  %168 = vmatpush1.msra.mxu0 0.0
  %169 = vmatprep.subr.mxu0 0.0
  %170 = vmatpush1.msra.mxu0 0.0
  %171 = vmatprep.subr.mxu0 0.0
  %172 = vmatpush1.msra.mxu0 0.0
  %173 = vmatprep.subr.mxu0 0.0
  %174 = vmatpush1.msra.mxu0 0.0
  %175 = vmatprep.subr.mxu0 0.0
  %176 = vmatpush1.msra.mxu0 0.0
  %177 = vmatprep.subr.mxu0 0.0
  %178 = vmatpush1.msra.mxu0 0.0
  %179 = vmatprep.subr.mxu0 0.0
  %180 = vmatpush1.msra.mxu0 0.0
  %181 = vmatprep.subr.mxu0 0.0
  %182 = vmatpush1.msra.mxu0 0.0
  %183 = vmatprep.subr.mxu0 0.0
  %184 = vmatpush1.msra.mxu0 0.0
  %185 = vmatprep.subr.mxu0 0.0
  %186 = vmatpush1.msra.mxu0 0.0
  %187 = vmatprep.mubr.f32.mxu0 0.0
  %188 = vmatmul.mubr.f32.gmra.mrb[0].mxu0 %v37
  %v189 = vpop.f32.mrb[0].mxu0
  %v190 = vadd.f32 0.0, %v189
  %v191 = vpop.f32.mrb[0].mxu0
  %v192 = vadd.f32 0.0, %v191
  %193 = vdwg.mxu0
  %v194 = vsel %vm39, %v119, 0.0
  %v195 = vsel %vm39, %v121, 0.0
  %v196 = vadd.f32 %v194, %v195
  %v197 = vsel %vm39, %v190, 0.0
  %v198 = vadd.f32 %v196, %v197
  %v199 = vsel %vm39, %v192, 0.0
  %v200 = vadd.f32 %v198, %v199
  %201 = vadd.xlane.f32.xlu0 %v200
  %v202 = vpop.xlane.xlu0 %201
  %v203 = vmul.f32 %v119, %v119
  %v204 = vmul.f32 %v121, %v121
  %v205 = vmul.f32 %v190, %v190
  %v206 = vmul.f32 %v192, %v192
  %v207 = vsel %vm39, %v203, 0.0
  %v208 = vsel %vm39, %v204, 0.0
  %v209 = vadd.f32 %v207, %v208
  %v210 = vsel %vm39, %v205, 0.0
  %v211 = vadd.f32 %v209, %v210
  %v212 = vsel %vm39, %v206, 0.0
  %v213 = vadd.f32 %v211, %v212
  %214 = vadd.xlane.f32.xlu0 %v213
  %v215 = vpop.xlane.xlu0 %214
  %v216 = vmul.f32 %v202, 0.001953125
  %v217 = vmul.f32 %v215, 0.001953125
  %v218 = vmul.f32 %v216, %v216
  %v219 = vsub.f32 %v217, %v218
  %v220 = vmax.f32 %v219, 0.0
  %v221 = vld [vmem:[%s2] sm:$0xf]
  %v222 = vadd.f32 %v220, 1e-05
  %v223 = vrsqrt.pop %v222
  %v224 = vmul.f32 %v223, %v221
  %v225 = vmul.f32 %v216, %v224
  %227 = vrot.lane.b32.xlu0 %v225, 1
  %v228 = vpop.permute.xlu0 %227
  %v230 = vsub.f32 %v221, %v228
  %232 = vset.pattern.permute.xlu0 0
  %233 = vperm.xlu0 %232, %v224
  %v234 = vpop.permute.xlu0 %233
  %v236 = vmul.f32 %v119, %v234
  %v237 = vmul.f32 %v121, %v234
  %v238 = vmul.f32 %v190, %v234
  %v239 = vmul.f32 %v192, %v234
  %241 = vset.pattern.permute.xlu0 1
  %242 = vperm.xlu0 %241, %v230
  %v243 = vpop.permute.xlu0 %242
  %v245 = vadd.f32 %v236, %v243
  %v246 = vadd.f32 %v237, %v243
  %v247 = vadd.f32 %v238, %v243
  %v248 = vadd.f32 %v239, %v243
  %v249 = vmax.f32 %v245, 0.0
  %v250 = vmax.f32 %v246, 0.0
  %v251 = vmax.f32 %v247, 0.0
  %v252 = vmax.f32 %v248, 0.0
  %v255 = vcombine.low %v249, %v250
  %257 = vst [vmem:[%s3] sm:$0xff] %v255
  %v260 = vcombine.low %v251, %v252
  %s262 = scalar_lea.vmem %s3, 8
  %263 = vst [vmem:[%s262] sm:$0xff] %v260
  // Predicated region
  $region14: #{cnn1_forward.1} parent=0 // pred_check
    _
  $region15: #{cnn1_forward.1} parent=0 // pred_check_branch
    %265 = sbr.rel (0) target = $region17
  $region16: #{cnn1_forward.1} parent=0 // pred_region
    _
  $region17: #{cnn1_forward.1} parent=0 // pred_fallthru
    _
  // Predicated region
  $region18: #{cnn1_forward.1} parent=0 // pred_check
    _
  $region19: #{cnn1_forward.1} parent=0 // pred_check_branch
    %267 = sbr.rel (0) target = $region21
  $region20: #{cnn1_forward.1} parent=0 // pred_region
    _
  $region21: #{cnn1_forward.1} parent=0 // pred_fallthru
    _

</llo_original>
